<compile_context>
chip_gen: v7x
topology: tpu7x:2x2x1
jax: 0.10.0
libtpu: 0.0.40
codegen_flags: <defaults>
</compile_context>

<pallas_src>
import functools
import math

import jax
import jax.numpy as jnp
from jax.experimental import pallas as pl
from jax.experimental.pallas import tpu as pltpu


def _token_embedding_kernel(tok_ref, emb_hbm, o_ref, buf, sems, *, scale, tb):
    # tok_ref: (N_pad,)  int32 token ids, scalar-prefetched into SMEM
    # emb_hbm: (V, E)    float32 embedding table, left in HBM (pl.ANY)
    # o_ref:   (TB, E)   float32 output tile (VMEM, auto-pipelined)
    # buf:     (TB, E)   float32 VMEM gather buffer
    # sems:    (TB,)     DMA semaphores, one per in-flight row copy
    i = pl.program_id(0)
    base = i * tb

    # Issue all TB row fetches first so they are in flight concurrently.
    copies = []
    for j in range(tb):
        row = tok_ref[base + j]                      # scalar read from SMEM
        cp = pltpu.make_async_copy(
            emb_hbm.at[pl.ds(row, 1), :],            # (1, E) row in HBM
            buf.at[pl.ds(j, 1), :],                  # (1, E) slot in VMEM
            sems.at[j],
        )
        cp.start()
        copies.append(cp)

    for cp in copies:
        cp.wait()

    # Single fused scale + cast pass over the gathered tile (mem-bound path).
    o_ref[...] = (buf[...] * scale).astype(o_ref.dtype)


def token_embedding(tokens, emb_table, *, token_block=8):
    """tokens: (B, S) int, emb_table: (V, E) float32 -> (B, S, E) float32.

    For large workloads raise token_block (e.g. 64-256, multiple of 8) to
    amortize per-step overhead further; N is padded to a multiple of it.
    """
    B, S = tokens.shape
    V, E = emb_table.shape
    N = B * S
    TB = token_block
    N_pad = ((N + TB - 1) // TB) * TB
    scale = float(math.sqrt(E))

    tok_flat = tokens.reshape(N).astype(jnp.int32)
    # Clamp so a bad id can never trigger an out-of-bounds DMA on TPU.
    tok_flat = jnp.clip(tok_flat, 0, V - 1)
    if N_pad != N:
        tok_flat = jnp.concatenate(
            [tok_flat, jnp.zeros((N_pad - N,), jnp.int32)])

    out = pl.pallas_call(
        functools.partial(_token_embedding_kernel, scale=scale, tb=TB),
        out_shape=jax.ShapeDtypeStruct((N_pad, E), emb_table.dtype),
        grid_spec=pltpu.PrefetchScalarGridSpec(
            num_scalar_prefetch=1,                   # token ids -> SMEM
            grid=(N_pad // TB,),
            in_specs=[
                # Embedding table stays in HBM; rows are DMA-gathered manually.
                pl.BlockSpec(memory_space=pl.ANY),
            ],
            out_specs=pl.BlockSpec((TB, E), lambda i, tok: (i, 0)),
            scratch_shapes=[
                pltpu.VMEM((TB, E), emb_table.dtype),
                pltpu.SemaphoreType.DMA((TB,)),
            ],
        ),
        compiler_params=pltpu.CompilerParams(
            dimension_semantics=("parallel",),       # safe: steps independent
            vmem_limit_bytes=32 * 1024 * 1024,       # fits all generations
        ),
        cost_estimate=pl.CostEstimate(
            flops=N_pad * E,                         # one multiply per element
            transcendentals=0,
            bytes_accessed=2 * N_pad * E * 4 + N_pad * 4,
        ),
    )(tok_flat, emb_table)

    return out[:N].reshape(B, S, E)


if __name__ == "__main__":
    # Small, PyTorch-consistent shapes.
    B, S = 2, 8            # tokens: (batch, seq)
    VOCAB, EMB = 64, 128   # embedding table: (vocab_size, emb_size)

    key = jax.random.PRNGKey(0)
    k_tok, k_emb = jax.random.split(key)

    tokens = jax.random.randint(k_tok, (B, S), 0, VOCAB, dtype=jnp.int32)
    # torch.nn.Embedding default init ~ N(0, 1)
    emb_table = jax.random.normal(k_emb, (VOCAB, EMB), dtype=jnp.float32)

    out = token_embedding(tokens, emb_table)
    out = jax.block_until_ready(out)

    # Pure-JAX reference check of the exact forward semantics.
    ref = jnp.take(emb_table, tokens, axis=0) * math.sqrt(EMB)
    assert out.shape == (B, S, EMB)
    assert out.dtype == jnp.float32
    assert jnp.allclose(out, ref, atol=1e-5, rtol=1e-5)

    print("KERNEL_OK")
</pallas_src>

<mosaic_0001>
module attributes {stable_mosaic.version = 11 : i64} {
  func.func @_token_embedding_kernel(%arg0: i32, %arg1: memref<16xi32, #tpu.memory_space<smem>>, %arg2: memref<64x128xf32, #tpu.memory_space<any>>, %arg3: memref<8x128xf32, #tpu.memory_space<vmem>>, %arg4: memref<8x128xf32, #tpu.memory_space<vmem>>, %arg5: memref<8x!tpu.dma_semaphore, #tpu.memory_space<semaphore_mem>>) attributes {dimension_semantics = [#tpu.dimension_semantics<parallel>], iteration_bounds = array<i64: 2>, scalar_prefetch = 1 : i64, scratch_operands = 2 : i64, tpu.core_type = #tpu.core_type<tc>, window_params = [{}, {transform_indices = @transform_1, window_bounds = array<i64: 8, 128>}]} {
    %c8_i32 = arith.constant 8 : i32
    %0 = arith.muli %arg0, %c8_i32 : i32
    %c0_i32 = arith.constant 0 : i32
    %1 = arith.addi %0, %c0_i32 : i32
    %2 = arith.index_cast %1 : i32 to index
    %3 = memref.load %arg1[%2] : memref<16xi32, #tpu.memory_space<smem>>
    %c0_i32_0 = arith.constant 0 : i32
    %c0_i32_1 = arith.constant 0 : i32
    %4 = tpu.memref_slice %arg2[%3, %c0_i32_1] : memref<64x128xf32, #tpu.memory_space<any>> -> memref<1x128xf32, #tpu.memory_space<any>>
    %c0_i32_2 = arith.constant 0 : i32
    %c0_i32_3 = arith.constant 0 : i32
    %5 = tpu.memref_slice %arg4[%c0_i32_2, %c0_i32_3] : memref<8x128xf32, #tpu.memory_space<vmem>> -> memref<1x128xf32, #tpu.memory_space<vmem>>
    %6 = tpu.memref_slice %arg5[%c0_i32_0] : memref<8x!tpu.dma_semaphore, #tpu.memory_space<semaphore_mem>> -> memref<1x!tpu.dma_semaphore, #tpu.memory_space<semaphore_mem>>
    %7 = tpu.memref_squeeze %6 : memref<1x!tpu.dma_semaphore, #tpu.memory_space<semaphore_mem>> -> memref<!tpu.dma_semaphore, #tpu.memory_space<semaphore_mem>>
    tpu.enqueue_dma source(%4 : memref<1x128xf32, #tpu.memory_space<any>>) target(%5 : memref<1x128xf32, #tpu.memory_space<vmem>>) target_semaphore(%7 : memref<!tpu.dma_semaphore, #tpu.memory_space<semaphore_mem>>)
    %c1_i32 = arith.constant 1 : i32
    %8 = arith.addi %0, %c1_i32 : i32
    %9 = arith.index_cast %8 : i32 to index
    %10 = memref.load %arg1[%9] : memref<16xi32, #tpu.memory_space<smem>>
    %c1_i32_4 = arith.constant 1 : i32
    %c0_i32_5 = arith.constant 0 : i32
    %11 = tpu.memref_slice %arg2[%10, %c0_i32_5] : memref<64x128xf32, #tpu.memory_space<any>> -> memref<1x128xf32, #tpu.memory_space<any>>
    %c1_i32_6 = arith.constant 1 : i32
    %c0_i32_7 = arith.constant 0 : i32
    %12 = tpu.memref_slice %arg4[%c1_i32_6, %c0_i32_7] : memref<8x128xf32, #tpu.memory_space<vmem>> -> memref<1x128xf32, #tpu.memory_space<vmem>>
    %13 = tpu.memref_slice %arg5[%c1_i32_4] : memref<8x!tpu.dma_semaphore, #tpu.memory_space<semaphore_mem>> -> memref<1x!tpu.dma_semaphore, #tpu.memory_space<semaphore_mem>>
    %14 = tpu.memref_squeeze %13 : memref<1x!tpu.dma_semaphore, #tpu.memory_space<semaphore_mem>> -> memref<!tpu.dma_semaphore, #tpu.memory_space<semaphore_mem>>
    tpu.enqueue_dma source(%11 : memref<1x128xf32, #tpu.memory_space<any>>) target(%12 : memref<1x128xf32, #tpu.memory_space<vmem>>) target_semaphore(%14 : memref<!tpu.dma_semaphore, #tpu.memory_space<semaphore_mem>>)
    %c2_i32 = arith.constant 2 : i32
    %15 = arith.addi %0, %c2_i32 : i32
    %16 = arith.index_cast %15 : i32 to index
    %17 = memref.load %arg1[%16] : memref<16xi32, #tpu.memory_space<smem>>
    %c2_i32_8 = arith.constant 2 : i32
    %c0_i32_9 = arith.constant 0 : i32
    %18 = tpu.memref_slice %arg2[%17, %c0_i32_9] : memref<64x128xf32, #tpu.memory_space<any>> -> memref<1x128xf32, #tpu.memory_space<any>>
    %c2_i32_10 = arith.constant 2 : i32
    %c0_i32_11 = arith.constant 0 : i32
    %19 = tpu.memref_slice %arg4[%c2_i32_10, %c0_i32_11] : memref<8x128xf32, #tpu.memory_space<vmem>> -> memref<1x128xf32, #tpu.memory_space<vmem>>
    %20 = tpu.memref_slice %arg5[%c2_i32_8] : memref<8x!tpu.dma_semaphore, #tpu.memory_space<semaphore_mem>> -> memref<1x!tpu.dma_semaphore, #tpu.memory_space<semaphore_mem>>
    %21 = tpu.memref_squeeze %20 : memref<1x!tpu.dma_semaphore, #tpu.memory_space<semaphore_mem>> -> memref<!tpu.dma_semaphore, #tpu.memory_space<semaphore_mem>>
    tpu.enqueue_dma source(%18 : memref<1x128xf32, #tpu.memory_space<any>>) target(%19 : memref<1x128xf32, #tpu.memory_space<vmem>>) target_semaphore(%21 : memref<!tpu.dma_semaphore, #tpu.memory_space<semaphore_mem>>)
    %c3_i32 = arith.constant 3 : i32
    %22 = arith.addi %0, %c3_i32 : i32
    %23 = arith.index_cast %22 : i32 to index
    %24 = memref.load %arg1[%23] : memref<16xi32, #tpu.memory_space<smem>>
    %c3_i32_12 = arith.constant 3 : i32
    %c0_i32_13 = arith.constant 0 : i32
    %25 = tpu.memref_slice %arg2[%24, %c0_i32_13] : memref<64x128xf32, #tpu.memory_space<any>> -> memref<1x128xf32, #tpu.memory_space<any>>
    %c3_i32_14 = arith.constant 3 : i32
    %c0_i32_15 = arith.constant 0 : i32
    %26 = tpu.memref_slice %arg4[%c3_i32_14, %c0_i32_15] : memref<8x128xf32, #tpu.memory_space<vmem>> -> memref<1x128xf32, #tpu.memory_space<vmem>>
    %27 = tpu.memref_slice %arg5[%c3_i32_12] : memref<8x!tpu.dma_semaphore, #tpu.memory_space<semaphore_mem>> -> memref<1x!tpu.dma_semaphore, #tpu.memory_space<semaphore_mem>>
    %28 = tpu.memref_squeeze %27 : memref<1x!tpu.dma_semaphore, #tpu.memory_space<semaphore_mem>> -> memref<!tpu.dma_semaphore, #tpu.memory_space<semaphore_mem>>
    tpu.enqueue_dma source(%25 : memref<1x128xf32, #tpu.memory_space<any>>) target(%26 : memref<1x128xf32, #tpu.memory_space<vmem>>) target_semaphore(%28 : memref<!tpu.dma_semaphore, #tpu.memory_space<semaphore_mem>>)
    %c4_i32 = arith.constant 4 : i32
    %29 = arith.addi %0, %c4_i32 : i32
    %30 = arith.index_cast %29 : i32 to index
    %31 = memref.load %arg1[%30] : memref<16xi32, #tpu.memory_space<smem>>
    %c4_i32_16 = arith.constant 4 : i32
    %c0_i32_17 = arith.constant 0 : i32
    %32 = tpu.memref_slice %arg2[%31, %c0_i32_17] : memref<64x128xf32, #tpu.memory_space<any>> -> memref<1x128xf32, #tpu.memory_space<any>>
    %c4_i32_18 = arith.constant 4 : i32
    %c0_i32_19 = arith.constant 0 : i32
    %33 = tpu.memref_slice %arg4[%c4_i32_18, %c0_i32_19] : memref<8x128xf32, #tpu.memory_space<vmem>> -> memref<1x128xf32, #tpu.memory_space<vmem>>
    %34 = tpu.memref_slice %arg5[%c4_i32_16] : memref<8x!tpu.dma_semaphore, #tpu.memory_space<semaphore_mem>> -> memref<1x!tpu.dma_semaphore, #tpu.memory_space<semaphore_mem>>
    %35 = tpu.memref_squeeze %34 : memref<1x!tpu.dma_semaphore, #tpu.memory_space<semaphore_mem>> -> memref<!tpu.dma_semaphore, #tpu.memory_space<semaphore_mem>>
    tpu.enqueue_dma source(%32 : memref<1x128xf32, #tpu.memory_space<any>>) target(%33 : memref<1x128xf32, #tpu.memory_space<vmem>>) target_semaphore(%35 : memref<!tpu.dma_semaphore, #tpu.memory_space<semaphore_mem>>)
    %c5_i32 = arith.constant 5 : i32
    %36 = arith.addi %0, %c5_i32 : i32
    %37 = arith.index_cast %36 : i32 to index
    %38 = memref.load %arg1[%37] : memref<16xi32, #tpu.memory_space<smem>>
    %c5_i32_20 = arith.constant 5 : i32
    %c0_i32_21 = arith.constant 0 : i32
    %39 = tpu.memref_slice %arg2[%38, %c0_i32_21] : memref<64x128xf32, #tpu.memory_space<any>> -> memref<1x128xf32, #tpu.memory_space<any>>
    %c5_i32_22 = arith.constant 5 : i32
    %c0_i32_23 = arith.constant 0 : i32
    %40 = tpu.memref_slice %arg4[%c5_i32_22, %c0_i32_23] : memref<8x128xf32, #tpu.memory_space<vmem>> -> memref<1x128xf32, #tpu.memory_space<vmem>>
    %41 = tpu.memref_slice %arg5[%c5_i32_20] : memref<8x!tpu.dma_semaphore, #tpu.memory_space<semaphore_mem>> -> memref<1x!tpu.dma_semaphore, #tpu.memory_space<semaphore_mem>>
    %42 = tpu.memref_squeeze %41 : memref<1x!tpu.dma_semaphore, #tpu.memory_space<semaphore_mem>> -> memref<!tpu.dma_semaphore, #tpu.memory_space<semaphore_mem>>
    tpu.enqueue_dma source(%39 : memref<1x128xf32, #tpu.memory_space<any>>) target(%40 : memref<1x128xf32, #tpu.memory_space<vmem>>) target_semaphore(%42 : memref<!tpu.dma_semaphore, #tpu.memory_space<semaphore_mem>>)
    %c6_i32 = arith.constant 6 : i32
    %43 = arith.addi %0, %c6_i32 : i32
    %44 = arith.index_cast %43 : i32 to index
    %45 = memref.load %arg1[%44] : memref<16xi32, #tpu.memory_space<smem>>
    %c6_i32_24 = arith.constant 6 : i32
    %c0_i32_25 = arith.constant 0 : i32
    %46 = tpu.memref_slice %arg2[%45, %c0_i32_25] : memref<64x128xf32, #tpu.memory_space<any>> -> memref<1x128xf32, #tpu.memory_space<any>>
    %c6_i32_26 = arith.constant 6 : i32
    %c0_i32_27 = arith.constant 0 : i32
    %47 = tpu.memref_slice %arg4[%c6_i32_26, %c0_i32_27] : memref<8x128xf32, #tpu.memory_space<vmem>> -> memref<1x128xf32, #tpu.memory_space<vmem>>
    %48 = tpu.memref_slice %arg5[%c6_i32_24] : memref<8x!tpu.dma_semaphore, #tpu.memory_space<semaphore_mem>> -> memref<1x!tpu.dma_semaphore, #tpu.memory_space<semaphore_mem>>
    %49 = tpu.memref_squeeze %48 : memref<1x!tpu.dma_semaphore, #tpu.memory_space<semaphore_mem>> -> memref<!tpu.dma_semaphore, #tpu.memory_space<semaphore_mem>>
    tpu.enqueue_dma source(%46 : memref<1x128xf32, #tpu.memory_space<any>>) target(%47 : memref<1x128xf32, #tpu.memory_space<vmem>>) target_semaphore(%49 : memref<!tpu.dma_semaphore, #tpu.memory_space<semaphore_mem>>)
    %c7_i32 = arith.constant 7 : i32
    %50 = arith.addi %0, %c7_i32 : i32
    %51 = arith.index_cast %50 : i32 to index
    %52 = memref.load %arg1[%51] : memref<16xi32, #tpu.memory_space<smem>>
    %c7_i32_28 = arith.constant 7 : i32
    %c0_i32_29 = arith.constant 0 : i32
    %53 = tpu.memref_slice %arg2[%52, %c0_i32_29] : memref<64x128xf32, #tpu.memory_space<any>> -> memref<1x128xf32, #tpu.memory_space<any>>
    %c7_i32_30 = arith.constant 7 : i32
    %c0_i32_31 = arith.constant 0 : i32
    %54 = tpu.memref_slice %arg4[%c7_i32_30, %c0_i32_31] : memref<8x128xf32, #tpu.memory_space<vmem>> -> memref<1x128xf32, #tpu.memory_space<vmem>>
    %55 = tpu.memref_slice %arg5[%c7_i32_28] : memref<8x!tpu.dma_semaphore, #tpu.memory_space<semaphore_mem>> -> memref<1x!tpu.dma_semaphore, #tpu.memory_space<semaphore_mem>>
    %56 = tpu.memref_squeeze %55 : memref<1x!tpu.dma_semaphore, #tpu.memory_space<semaphore_mem>> -> memref<!tpu.dma_semaphore, #tpu.memory_space<semaphore_mem>>
    tpu.enqueue_dma source(%53 : memref<1x128xf32, #tpu.memory_space<any>>) target(%54 : memref<1x128xf32, #tpu.memory_space<vmem>>) target_semaphore(%56 : memref<!tpu.dma_semaphore, #tpu.memory_space<semaphore_mem>>)
    %c0_i32_32 = arith.constant 0 : i32
    %c0_i32_33 = arith.constant 0 : i32
    %57 = tpu.memref_slice %arg2[%3, %c0_i32_33] : memref<64x128xf32, #tpu.memory_space<any>> -> memref<1x128xf32, #tpu.memory_space<any>>
    %c0_i32_34 = arith.constant 0 : i32
    %c0_i32_35 = arith.constant 0 : i32
    %58 = tpu.memref_slice %arg4[%c0_i32_34, %c0_i32_35] : memref<8x128xf32, #tpu.memory_space<vmem>> -> memref<1x128xf32, #tpu.memory_space<vmem>>
    %59 = tpu.memref_slice %arg5[%c0_i32_32] : memref<8x!tpu.dma_semaphore, #tpu.memory_space<semaphore_mem>> -> memref<1x!tpu.dma_semaphore, #tpu.memory_space<semaphore_mem>>
    %60 = tpu.memref_squeeze %59 : memref<1x!tpu.dma_semaphore, #tpu.memory_space<semaphore_mem>> -> memref<!tpu.dma_semaphore, #tpu.memory_space<semaphore_mem>>
    tpu.wait_dma2 semaphore(%60 : memref<!tpu.dma_semaphore, #tpu.memory_space<semaphore_mem>>) src(%57 : memref<1x128xf32, #tpu.memory_space<any>>) dst(%58 : memref<1x128xf32, #tpu.memory_space<vmem>>)
    %c1_i32_36 = arith.constant 1 : i32
    %c0_i32_37 = arith.constant 0 : i32
    %61 = tpu.memref_slice %arg2[%10, %c0_i32_37] : memref<64x128xf32, #tpu.memory_space<any>> -> memref<1x128xf32, #tpu.memory_space<any>>
    %c1_i32_38 = arith.constant 1 : i32
    %c0_i32_39 = arith.constant 0 : i32
    %62 = tpu.memref_slice %arg4[%c1_i32_38, %c0_i32_39] : memref<8x128xf32, #tpu.memory_space<vmem>> -> memref<1x128xf32, #tpu.memory_space<vmem>>
    %63 = tpu.memref_slice %arg5[%c1_i32_36] : memref<8x!tpu.dma_semaphore, #tpu.memory_space<semaphore_mem>> -> memref<1x!tpu.dma_semaphore, #tpu.memory_space<semaphore_mem>>
    %64 = tpu.memref_squeeze %63 : memref<1x!tpu.dma_semaphore, #tpu.memory_space<semaphore_mem>> -> memref<!tpu.dma_semaphore, #tpu.memory_space<semaphore_mem>>
    tpu.wait_dma2 semaphore(%64 : memref<!tpu.dma_semaphore, #tpu.memory_space<semaphore_mem>>) src(%61 : memref<1x128xf32, #tpu.memory_space<any>>) dst(%62 : memref<1x128xf32, #tpu.memory_space<vmem>>)
    %c2_i32_40 = arith.constant 2 : i32
    %c0_i32_41 = arith.constant 0 : i32
    %65 = tpu.memref_slice %arg2[%17, %c0_i32_41] : memref<64x128xf32, #tpu.memory_space<any>> -> memref<1x128xf32, #tpu.memory_space<any>>
    %c2_i32_42 = arith.constant 2 : i32
    %c0_i32_43 = arith.constant 0 : i32
    %66 = tpu.memref_slice %arg4[%c2_i32_42, %c0_i32_43] : memref<8x128xf32, #tpu.memory_space<vmem>> -> memref<1x128xf32, #tpu.memory_space<vmem>>
    %67 = tpu.memref_slice %arg5[%c2_i32_40] : memref<8x!tpu.dma_semaphore, #tpu.memory_space<semaphore_mem>> -> memref<1x!tpu.dma_semaphore, #tpu.memory_space<semaphore_mem>>
    %68 = tpu.memref_squeeze %67 : memref<1x!tpu.dma_semaphore, #tpu.memory_space<semaphore_mem>> -> memref<!tpu.dma_semaphore, #tpu.memory_space<semaphore_mem>>
    tpu.wait_dma2 semaphore(%68 : memref<!tpu.dma_semaphore, #tpu.memory_space<semaphore_mem>>) src(%65 : memref<1x128xf32, #tpu.memory_space<any>>) dst(%66 : memref<1x128xf32, #tpu.memory_space<vmem>>)
    %c3_i32_44 = arith.constant 3 : i32
    %c0_i32_45 = arith.constant 0 : i32
    %69 = tpu.memref_slice %arg2[%24, %c0_i32_45] : memref<64x128xf32, #tpu.memory_space<any>> -> memref<1x128xf32, #tpu.memory_space<any>>
    %c3_i32_46 = arith.constant 3 : i32
    %c0_i32_47 = arith.constant 0 : i32
    %70 = tpu.memref_slice %arg4[%c3_i32_46, %c0_i32_47] : memref<8x128xf32, #tpu.memory_space<vmem>> -> memref<1x128xf32, #tpu.memory_space<vmem>>
    %71 = tpu.memref_slice %arg5[%c3_i32_44] : memref<8x!tpu.dma_semaphore, #tpu.memory_space<semaphore_mem>> -> memref<1x!tpu.dma_semaphore, #tpu.memory_space<semaphore_mem>>
    %72 = tpu.memref_squeeze %71 : memref<1x!tpu.dma_semaphore, #tpu.memory_space<semaphore_mem>> -> memref<!tpu.dma_semaphore, #tpu.memory_space<semaphore_mem>>
    tpu.wait_dma2 semaphore(%72 : memref<!tpu.dma_semaphore, #tpu.memory_space<semaphore_mem>>) src(%69 : memref<1x128xf32, #tpu.memory_space<any>>) dst(%70 : memref<1x128xf32, #tpu.memory_space<vmem>>)
    %c4_i32_48 = arith.constant 4 : i32
    %c0_i32_49 = arith.constant 0 : i32
    %73 = tpu.memref_slice %arg2[%31, %c0_i32_49] : memref<64x128xf32, #tpu.memory_space<any>> -> memref<1x128xf32, #tpu.memory_space<any>>
    %c4_i32_50 = arith.constant 4 : i32
    %c0_i32_51 = arith.constant 0 : i32
    %74 = tpu.memref_slice %arg4[%c4_i32_50, %c0_i32_51] : memref<8x128xf32, #tpu.memory_space<vmem>> -> memref<1x128xf32, #tpu.memory_space<vmem>>
    %75 = tpu.memref_slice %arg5[%c4_i32_48] : memref<8x!tpu.dma_semaphore, #tpu.memory_space<semaphore_mem>> -> memref<1x!tpu.dma_semaphore, #tpu.memory_space<semaphore_mem>>
    %76 = tpu.memref_squeeze %75 : memref<1x!tpu.dma_semaphore, #tpu.memory_space<semaphore_mem>> -> memref<!tpu.dma_semaphore, #tpu.memory_space<semaphore_mem>>
    tpu.wait_dma2 semaphore(%76 : memref<!tpu.dma_semaphore, #tpu.memory_space<semaphore_mem>>) src(%73 : memref<1x128xf32, #tpu.memory_space<any>>) dst(%74 : memref<1x128xf32, #tpu.memory_space<vmem>>)
    %c5_i32_52 = arith.constant 5 : i32
    %c0_i32_53 = arith.constant 0 : i32
    %77 = tpu.memref_slice %arg2[%38, %c0_i32_53] : memref<64x128xf32, #tpu.memory_space<any>> -> memref<1x128xf32, #tpu.memory_space<any>>
    %c5_i32_54 = arith.constant 5 : i32
    %c0_i32_55 = arith.constant 0 : i32
    %78 = tpu.memref_slice %arg4[%c5_i32_54, %c0_i32_55] : memref<8x128xf32, #tpu.memory_space<vmem>> -> memref<1x128xf32, #tpu.memory_space<vmem>>
    %79 = tpu.memref_slice %arg5[%c5_i32_52] : memref<8x!tpu.dma_semaphore, #tpu.memory_space<semaphore_mem>> -> memref<1x!tpu.dma_semaphore, #tpu.memory_space<semaphore_mem>>
    %80 = tpu.memref_squeeze %79 : memref<1x!tpu.dma_semaphore, #tpu.memory_space<semaphore_mem>> -> memref<!tpu.dma_semaphore, #tpu.memory_space<semaphore_mem>>
    tpu.wait_dma2 semaphore(%80 : memref<!tpu.dma_semaphore, #tpu.memory_space<semaphore_mem>>) src(%77 : memref<1x128xf32, #tpu.memory_space<any>>) dst(%78 : memref<1x128xf32, #tpu.memory_space<vmem>>)
    %c6_i32_56 = arith.constant 6 : i32
    %c0_i32_57 = arith.constant 0 : i32
    %81 = tpu.memref_slice %arg2[%45, %c0_i32_57] : memref<64x128xf32, #tpu.memory_space<any>> -> memref<1x128xf32, #tpu.memory_space<any>>
    %c6_i32_58 = arith.constant 6 : i32
    %c0_i32_59 = arith.constant 0 : i32
    %82 = tpu.memref_slice %arg4[%c6_i32_58, %c0_i32_59] : memref<8x128xf32, #tpu.memory_space<vmem>> -> memref<1x128xf32, #tpu.memory_space<vmem>>
    %83 = tpu.memref_slice %arg5[%c6_i32_56] : memref<8x!tpu.dma_semaphore, #tpu.memory_space<semaphore_mem>> -> memref<1x!tpu.dma_semaphore, #tpu.memory_space<semaphore_mem>>
    %84 = tpu.memref_squeeze %83 : memref<1x!tpu.dma_semaphore, #tpu.memory_space<semaphore_mem>> -> memref<!tpu.dma_semaphore, #tpu.memory_space<semaphore_mem>>
    tpu.wait_dma2 semaphore(%84 : memref<!tpu.dma_semaphore, #tpu.memory_space<semaphore_mem>>) src(%81 : memref<1x128xf32, #tpu.memory_space<any>>) dst(%82 : memref<1x128xf32, #tpu.memory_space<vmem>>)
    %c7_i32_60 = arith.constant 7 : i32
    %c0_i32_61 = arith.constant 0 : i32
    %85 = tpu.memref_slice %arg2[%52, %c0_i32_61] : memref<64x128xf32, #tpu.memory_space<any>> -> memref<1x128xf32, #tpu.memory_space<any>>
    %c7_i32_62 = arith.constant 7 : i32
    %c0_i32_63 = arith.constant 0 : i32
    %86 = tpu.memref_slice %arg4[%c7_i32_62, %c0_i32_63] : memref<8x128xf32, #tpu.memory_space<vmem>> -> memref<1x128xf32, #tpu.memory_space<vmem>>
    %87 = tpu.memref_slice %arg5[%c7_i32_60] : memref<8x!tpu.dma_semaphore, #tpu.memory_space<semaphore_mem>> -> memref<1x!tpu.dma_semaphore, #tpu.memory_space<semaphore_mem>>
    %88 = tpu.memref_squeeze %87 : memref<1x!tpu.dma_semaphore, #tpu.memory_space<semaphore_mem>> -> memref<!tpu.dma_semaphore, #tpu.memory_space<semaphore_mem>>
    tpu.wait_dma2 semaphore(%88 : memref<!tpu.dma_semaphore, #tpu.memory_space<semaphore_mem>>) src(%85 : memref<1x128xf32, #tpu.memory_space<any>>) dst(%86 : memref<1x128xf32, #tpu.memory_space<vmem>>)
    %c0 = arith.constant 0 : index
    %c0_64 = arith.constant 0 : index
    %89 = vector.load %arg4[%c0, %c0_64] : memref<8x128xf32, #tpu.memory_space<vmem>>, vector<8x128xf32>
    %cst = arith.constant 11.3137083 : f32
    %90 = vector.broadcast %cst : f32 to vector<8x128xf32>
    %91 = arith.mulf %89, %90 : vector<8x128xf32>
    %c0_65 = arith.constant 0 : index
    %c0_66 = arith.constant 0 : index
    %92 = vector.load %arg3[%c0_65, %c0_66] : memref<8x128xf32, #tpu.memory_space<vmem>>, vector<8x128xf32>
    tpu.vector_store %arg3[%c0_65, %c0_66], %91 {strides = array<i32>} : memref<8x128xf32, #tpu.memory_space<vmem>>, vector<8x128xf32>,
    return
  }
  func.func @transform_1(%arg0: i32, %arg1: memref<16xi32, #tpu.memory_space<smem>>) -> (i32, i32) {
    %c0_i32 = arith.constant 0 : i32
    %c0_i32_0 = arith.constant 0 : i32
    return %arg0, %c0_i32 : i32, i32
  }
}

</mosaic_0001>

<llo_original>
// kernel: tpu_custom_call.1
$region0: #{tpu_custom_call.1}
  #allocation0 [shape = 'u32[]', space=smem, size = 0x4, offset = 0x4, fixed_abs, tag = 'smem constant byte address 0x4 - core index']
  #allocation1 [shape = 'u32[144,128]{1,0:T(1,128)}', space=vmem, size = 0x12000, scoped, tag = 'internal scratch']
  #allocation2 [shape = 'f32[8,128]{1,0:T(8,128)}', space=vmem, size = 0x1000, scoped, tag = 'scratch operand']
  #allocation3 [shape = 's32[8]{0}', space=sflag, size = 0x20, scoped, tag = 'scratch operand']
  #allocation4 [shape = 's32[1]{0}', space=sflag, size = 0x4, scoped, tag = 'scoped memory for tpu_custom_call.1']
  #allocation5 [shape = 'u8[512]{0}', space=smem, size = 0x200, scoped, tag = 'prefetched SMEM operand 0']
  #allocation8 [shape = 's32[]', space=sflag, size = 0x4, offset = 0, fixed_abs, tag = 'sflag constant byte address 0x0 - dummy sync flag']
  #allocation9 [shape = 's32[]', space=sflag, size = 0x4, offset = 0, fixed_abs, tag = 'sflag constant byte address 0x0 - dummy sync flag']
  #allocation10 [shape = 'u32[]', space=smem, size = 0x4, offset = 0x44, fixed_abs, tag = 'smem constant byte address 0x44 - assertion arg 0']
  #allocation11 [shape = 'u32[]', space=smem, size = 0x4, offset = 0x48, fixed_abs, tag = 'smem constant byte address 0x48 - assertion arg 1']
  #allocation12 [shape = 's32[]', space=sflag, size = 0x4, offset = 0, fixed_abs, tag = 'sflag constant byte address 0x0 - dummy sync flag']
  #allocation13 [shape = 's32[]', space=sflag, size = 0x4, offset = 0, fixed_abs, tag = 'sflag constant byte address 0x0 - dummy sync flag']
  #allocation14 [shape = 's32[]', space=sflag, size = 0x4, offset = 0, fixed_abs, tag = 'sflag constant byte address 0x0 - dummy sync flag']
  #allocation15 [shape = 's32[]', space=sflag, size = 0x4, offset = 0, fixed_abs, tag = 'sflag constant byte address 0x0 - dummy sync flag']
  #allocation16 [shape = 's32[]', space=sflag, size = 0x4, offset = 0, fixed_abs, tag = 'sflag constant byte address 0x0 - dummy sync flag']
  #allocation17 [shape = 's32[]', space=sflag, size = 0x4, offset = 0, fixed_abs, tag = 'sflag constant byte address 0x0 - dummy sync flag']
  #allocation18 [shape = 's32[]', space=sflag, size = 0x4, offset = 0, fixed_abs, tag = 'sflag constant byte address 0x0 - dummy sync flag']
  #allocation19 [shape = 's32[]', space=sflag, size = 0x4, offset = 0, fixed_abs, tag = 'sflag constant byte address 0x0 - dummy sync flag']
  #allocation20 [shape = 's32[]', space=sflag, size = 0x4, offset = 0, fixed_abs, tag = 'sflag constant byte address 0x0 - dummy sync flag']
  #allocation21 [shape = 's32[]', space=sflag, size = 0x4, offset = 0, fixed_abs, tag = 'sflag constant byte address 0x0 - dummy sync flag']
  #allocation22 [shape = 's32[]', space=sflag, size = 0x4, offset = 0, fixed_abs, tag = 'sflag constant byte address 0x0 - dummy sync flag']
  #allocation23 [shape = 's32[]', space=sflag, size = 0x4, offset = 0, fixed_abs, tag = 'sflag constant byte address 0x0 - dummy sync flag']
  #allocation24 [shape = 's32[]', space=sflag, size = 0x4, offset = 0, fixed_abs, tag = 'sflag constant byte address 0x0 - dummy sync flag']
  #allocation25 [shape = 's32[]', space=sflag, size = 0x4, offset = 0, fixed_abs, tag = 'sflag constant byte address 0x0 - dummy sync flag']
  %s0 = inlined_call_operand.hbm [shape: s32[16], index: 0, kind: input, shape index: {}]
  %s1 = inlined_call_operand.hbm [shape: f32[64,128], index: 1, kind: input, shape index: {}]
  %s2 = inlined_call_operand.hbm [shape: f32[16,128], index: 2, kind: output, shape index: {}]
  %s3 = sld [smem:[#allocation0]]
  $region57: #{tpu_custom_call.1} parent=0
    _
  %s5 = ssub.s32 1, %s3
  %s6 = scalar_select 0, %s5, %s3
  %8 = dma.hbm_to_smem %s0, 16, [#allocation5], [#allocation4]
  %9 = dma.done [#allocation4], 16
  %10 = sfence
  $region1: #{tpu_custom_call.1} parent=0
    #allocation6 [shape = 'u8[8192]{0}', space=vmem, size = 0x2000, scoped, tag = 'output window, operand 0']
    #allocation7 [shape = 's32[2]{0}', space=sflag, size = 0x8, scoped, tag = 'scoped memory for tpu_custom_call.1']
    %11 = vsyncpa [#allocation7], 0
    %s12 = scalar_lea.sflag [#allocation7], 1
    %13 = vsyncpa %s12, 0
    loop: start=0, step=1, limit=3
    $region2: #{tpu_custom_call.1} parent=1 // loop_pre_header
      _
    $region3: #{tpu_custom_call.1} parent=1 // loop_header
      %s15 = sphi 0, %s19
      %p16 = scmp.ge.s32.totalorder %s15, 3
      %s24 = sphi 0, %s26
      %s27 = sphi 0, %s24
      %s37 = sphi 0, %s27
    $region4: #{tpu_custom_call.1} parent=1 // loop_header_branch
      %18 = sbr.rel (%p16) target = $region8
    $region5: #{tpu_custom_call.1} parent=1 // loop_body
      %s20 = ssub.s32 %s15, 1
      %s21 = sadd.s32 %s15, 1
      %s22 = ssub.s32 %s15, %s21
      %p23 = scmp.eq.s32.totalorder %s22, 0
      %s25 = sadd.s32 %s24, 1
      %s26 = scalar_select %p23, %s24, %s25
      %p28 = pneg %p23
      %p29 = scmp.eq.s32.totalorder %s15, 1
      %p30 = por %p28, %p29
      %p31 = scmp.ne.s32.totalorder %s24, %s27
      %p32 = scmp.eq.s32.totalorder %s15, 0
      %p33 = por %p31, %p32
      %p34 = scmp.ne.s32.totalorder %s24, %s27
      %p35 = scmp.eq.s32.totalorder %s20, 1
      %p36 = por %p34, %p35
      %p38 = scmp.ne.s32.totalorder %s27, %s37
      %p39 = scmp.eq.s32.totalorder %s20, 0
      %p40 = por %p38, %p39
      %p41 = scmp.lt.s32.totalorder %s15, 2
      // Predicated region
      $region9: #{tpu_custom_call.1} parent=5 // pred_check
        %p42 = pneg %p41
      $region10: #{tpu_custom_call.1} parent=5 // pred_check_branch
        %44 = sbr.rel (%p42) target = $region12
      $region11: #{tpu_custom_call.1} parent=5 // pred_region
        %p45 = pneg %p33
        %p46 = pneg %p30
        %s47 = sand.u32 %s24, 1
        %s48 = scalar_lea.sflag [#allocation7], %s47
        %s49 = sand.u32 %s24, 1
        %s50 = smul.addr %s49, 8
        %s51 = scalar_lea.vmem [#allocation6], %s50
        %s52 = smul.u32 %s15, 8
        %s53 = sld [smem:[#allocation5 + %s52]]
        %s54 = smul.addr %s53, 16
        %s55 = scalar_lea.hbm %s1, %s54
        // Predicated region
        $region13: #{tpu_custom_call.1} parent=11 // pred_check
          _
        $region14: #{tpu_custom_call.1} parent=11 // pred_check_branch
          %57 = sbr.rel target = $region16
        $region15: #{tpu_custom_call.1} parent=11 // pred_region
          %58 = sst [smem:[#allocation10]] [#allocation9]
          %59 = sst [smem:[#allocation11]] [#allocation8]
        $region16: #{tpu_custom_call.1} parent=11 // pred_fallthru
          _
        %61 = shalt.err (0)
        %s63 = sshll.u32 [#allocation2], 4
        %s64 = int_to_ptr.vmem [resolvable:$true] %s63
        %66 = dma.hbm_to_vmem [thread:$0]  %s55, 16, %s64, [#allocation3]
        %s67 = sadd.s32 %s52, 1
        %s68 = sld [smem:[#allocation5 + %s67]]
        %s69 = smul.addr %s68, 16
        %s70 = scalar_lea.hbm %s1, %s69
        %s71 = scalar_lea.vmem [#allocation2], 1
        %s72 = scalar_lea.sflag [#allocation3], 1
        // Predicated region
        $region17: #{tpu_custom_call.1} parent=11 // pred_check
          _
        $region18: #{tpu_custom_call.1} parent=11 // pred_check_branch
          %74 = sbr.rel target = $region20
        $region19: #{tpu_custom_call.1} parent=11 // pred_region
          %75 = sst [smem:[#allocation10]] [#allocation13]
          %76 = sst [smem:[#allocation11]] [#allocation12]
        $region20: #{tpu_custom_call.1} parent=11 // pred_fallthru
          _
        %78 = shalt.err (0)
        %s80 = sshll.u32 %s71, 4
        %s81 = int_to_ptr.vmem [resolvable:$true] %s80
        %83 = dma.hbm_to_vmem [thread:$0]  %s70, 16, %s81, %s72
        %s84 = sadd.s32 %s52, 2
        %s85 = sld [smem:[#allocation5 + %s84]]
        %s86 = smul.addr %s85, 16
        %s87 = scalar_lea.hbm %s1, %s86
        %s88 = scalar_lea.vmem [#allocation2], 2
        %s89 = scalar_lea.sflag [#allocation3], 2
        // Predicated region
        $region21: #{tpu_custom_call.1} parent=11 // pred_check
          _
        $region22: #{tpu_custom_call.1} parent=11 // pred_check_branch
          %91 = sbr.rel target = $region24
        $region23: #{tpu_custom_call.1} parent=11 // pred_region
          %92 = sst [smem:[#allocation10]] [#allocation15]
          %93 = sst [smem:[#allocation11]] [#allocation14]
        $region24: #{tpu_custom_call.1} parent=11 // pred_fallthru
          _
        %95 = shalt.err (0)
        %s97 = sshll.u32 %s88, 4
        %s98 = int_to_ptr.vmem [resolvable:$true] %s97
        %100 = dma.hbm_to_vmem [thread:$0]  %s87, 16, %s98, %s89
        %s101 = sadd.s32 %s52, 3
        %s102 = sld [smem:[#allocation5 + %s101]]
        %s103 = smul.addr %s102, 16
        %s104 = scalar_lea.hbm %s1, %s103
        %s105 = scalar_lea.vmem [#allocation2], 3
        %s106 = scalar_lea.sflag [#allocation3], 3
        // Predicated region
        $region25: #{tpu_custom_call.1} parent=11 // pred_check
          _
        $region26: #{tpu_custom_call.1} parent=11 // pred_check_branch
          %108 = sbr.rel target = $region28
        $region27: #{tpu_custom_call.1} parent=11 // pred_region
          %109 = sst [smem:[#allocation10]] [#allocation17]
          %110 = sst [smem:[#allocation11]] [#allocation16]
        $region28: #{tpu_custom_call.1} parent=11 // pred_fallthru
          _
        %112 = shalt.err (0)
        %s114 = sshll.u32 %s105, 4
        %s115 = int_to_ptr.vmem [resolvable:$true] %s114
        %117 = dma.hbm_to_vmem [thread:$0]  %s104, 16, %s115, %s106
        %s118 = sadd.s32 %s52, 4
        %s119 = sld [smem:[#allocation5 + %s118]]
        %s120 = smul.addr %s119, 16
        %s121 = scalar_lea.hbm %s1, %s120
        %s122 = scalar_lea.vmem [#allocation2], 4
        %s123 = scalar_lea.sflag [#allocation3], 4
        // Predicated region
        $region29: #{tpu_custom_call.1} parent=11 // pred_check
          _
        $region30: #{tpu_custom_call.1} parent=11 // pred_check_branch
          %125 = sbr.rel target = $region32
        $region31: #{tpu_custom_call.1} parent=11 // pred_region
          %126 = sst [smem:[#allocation10]] [#allocation19]
          %127 = sst [smem:[#allocation11]] [#allocation18]
        $region32: #{tpu_custom_call.1} parent=11 // pred_fallthru
          _
        %129 = shalt.err (0)
        %s131 = sshll.u32 %s122, 4
        %s132 = int_to_ptr.vmem [resolvable:$true] %s131
        %134 = dma.hbm_to_vmem [thread:$0]  %s121, 16, %s132, %s123
        %s135 = sadd.s32 %s52, 5
        %s136 = sld [smem:[#allocation5 + %s135]]
        %s137 = smul.addr %s136, 16
        %s138 = scalar_lea.hbm %s1, %s137
        %s139 = scalar_lea.vmem [#allocation2], 5
        %s140 = scalar_lea.sflag [#allocation3], 5
        // Predicated region
        $region33: #{tpu_custom_call.1} parent=11 // pred_check
          _
        $region34: #{tpu_custom_call.1} parent=11 // pred_check_branch
          %142 = sbr.rel target = $region36
        $region35: #{tpu_custom_call.1} parent=11 // pred_region
          %143 = sst [smem:[#allocation10]] [#allocation21]
          %144 = sst [smem:[#allocation11]] [#allocation20]
        $region36: #{tpu_custom_call.1} parent=11 // pred_fallthru
          _
        %146 = shalt.err (0)
        %s148 = sshll.u32 %s139, 4
        %s149 = int_to_ptr.vmem [resolvable:$true] %s148
        %151 = dma.hbm_to_vmem [thread:$0]  %s138, 16, %s149, %s140
        %s152 = sadd.s32 %s52, 6
        %s153 = sld [smem:[#allocation5 + %s152]]
        %s154 = smul.addr %s153, 16
        %s155 = scalar_lea.hbm %s1, %s154
        %s156 = scalar_lea.vmem [#allocation2], 6
        %s157 = scalar_lea.sflag [#allocation3], 6
        // Predicated region
        $region37: #{tpu_custom_call.1} parent=11 // pred_check
          _
        $region38: #{tpu_custom_call.1} parent=11 // pred_check_branch
          %159 = sbr.rel target = $region40
        $region39: #{tpu_custom_call.1} parent=11 // pred_region
          %160 = sst [smem:[#allocation10]] [#allocation23]
          %161 = sst [smem:[#allocation11]] [#allocation22]
        $region40: #{tpu_custom_call.1} parent=11 // pred_fallthru
          _
        %163 = shalt.err (0)
        %s165 = sshll.u32 %s156, 4
        %s166 = int_to_ptr.vmem [resolvable:$true] %s165
        %168 = dma.hbm_to_vmem [thread:$0]  %s155, 16, %s166, %s157
        %s169 = sadd.s32 %s52, 7
        %s170 = sld [smem:[#allocation5 + %s169]]
        %s171 = smul.addr %s170, 16
        %s172 = scalar_lea.hbm %s1, %s171
        %s173 = scalar_lea.vmem [#allocation2], 7
        %s174 = scalar_lea.sflag [#allocation3], 7
        // Predicated region
        $region41: #{tpu_custom_call.1} parent=11 // pred_check
          _
        $region42: #{tpu_custom_call.1} parent=11 // pred_check_branch
          %176 = sbr.rel target = $region44
        $region43: #{tpu_custom_call.1} parent=11 // pred_region
          %177 = sst [smem:[#allocation10]] [#allocation25]
          %178 = sst [smem:[#allocation11]] [#allocation24]
        $region44: #{tpu_custom_call.1} parent=11 // pred_fallthru
          _
        %180 = shalt.err (0)
        %s182 = sshll.u32 %s173, 4
        %s183 = int_to_ptr.vmem [resolvable:$true] %s182
        %185 = dma.hbm_to_vmem [thread:$0]  %s172, 16, %s183, %s174
        %s186 = smul.u32 1, 1
        %s187 = sshll.u32 %s186, 4
        %188 = dma.done [#allocation3], %s187
        %s189 = sshll.u32 %s186, 4
        %190 = dma.done %s72, %s189
        %s191 = sshll.u32 %s186, 4
        %192 = dma.done %s89, %s191
        %s193 = sshll.u32 %s186, 4
        %194 = dma.done %s106, %s193
        %s195 = sshll.u32 %s186, 4
        %196 = dma.done %s123, %s195
        %s197 = sshll.u32 %s186, 4
        %198 = dma.done %s140, %s197
        %s199 = sshll.u32 %s186, 4
        %200 = dma.done %s157, %s199
        %s201 = sshll.u32 %s186, 4
        %202 = dma.done %s174, %s201
        %v203 = vld [vmem:[#allocation2] sm:$0xff]
        %v204 = vmul.f32 %v203, 11.313708
        %205 = vst [vmem:[%s51] sm:$0xff] %v204
        %s206 = sand.u32 %s24, 1
        %s207 = scalar_lea.sflag [#allocation7], %s206
        %s208 = sand.u32 %s24, 1
        %s209 = smul.addr %s208, 8
        %s210 = scalar_lea.vmem [#allocation6], %s209
        // Predicated region
        $region45: #{tpu_custom_call.1} parent=11 // pred_check
          %p211 = pneg %p30
        $region46: #{tpu_custom_call.1} parent=11 // pred_check_branch
          %213 = sbr.rel (%p211) target = $region48
        $region47: #{tpu_custom_call.1} parent=11 // pred_region
          %s215 = ssub.s32 128, 128
          %216 = vsyncadd %s207, %s215
          %s217 = smul.addr %s15, 128
          %s218 = scalar_lea.hbm %s2, %s217
          %s220 = sshll.u32 %s210, 4
          %s221 = int_to_ptr.vmem [resolvable:$true] %s220
          %223 = dma.vmem_to_hbm [thread:$0]  %s221, 128, %s218, %s207
        $region48: #{tpu_custom_call.1} parent=11 // pred_fallthru
          _
      $region12: #{tpu_custom_call.1} parent=5 // pred_fallthru
        _
      %p224 = scmp.le.s32.totalorder 1, %s15
      // Predicated region
      $region49: #{tpu_custom_call.1} parent=5 // pred_check
        %p225 = pneg %p224
      $region50: #{tpu_custom_call.1} parent=5 // pred_check_branch
        %227 = sbr.rel (%p225) target = $region52
      $region51: #{tpu_custom_call.1} parent=5 // pred_region
        %s228 = ssub.s32 %s15, 1
        // Predicated region
        $region53: #{tpu_custom_call.1} parent=51 // pred_check
          %p229 = pneg %p36
        $region54: #{tpu_custom_call.1} parent=51 // pred_check_branch
          %231 = sbr.rel (%p229) target = $region56
        $region55: #{tpu_custom_call.1} parent=51 // pred_region
          %s232 = sand.u32 %s27, 1
          %s233 = scalar_lea.sflag [#allocation7], %s232
          %s234 = sand.u32 %s27, 1
          %s235 = smul.addr %s234, 8
          %s236 = scalar_lea.vmem [#allocation6], %s235
          %237 = dma.done %s233, 128
        $region56: #{tpu_custom_call.1} parent=51 // pred_fallthru
          _
      $region52: #{tpu_custom_call.1} parent=5 // pred_fallthru
        _
    $region6: #{tpu_custom_call.1} parent=1 // loop_footer
      %s19 = sadd.s32 1, %s15
    $region7: #{tpu_custom_call.1} parent=1 // loop_footer_branch
      %14 = sbr.rel target = $region3
    $region8: #{tpu_custom_call.1} parent=1 // loop_exit
      _
    %238 = vsyncpa [#allocation7], 1
    %s239 = scalar_lea.sflag [#allocation7], 1
    %240 = vsyncpa %s239, 1
  %241 = vsyncmov [#allocation3]
  %s242 = vpop.sfrf %241
  %p243 = scmp.eq.s32.totalorder %s242, 0
  %p244 = pneg %p243
  %246 = shalt.err (%p244)
  %s247 = scalar_lea.sflag [#allocation3], 1
  %248 = vsyncmov %s247
  %s249 = vpop.sfrf %248
  %p250 = scmp.eq.s32.totalorder %s249, 0
  %p251 = pneg %p250
  %253 = shalt.err (%p251)
  %s254 = scalar_lea.sflag [#allocation3], 2
  %255 = vsyncmov %s254
  %s256 = vpop.sfrf %255
  %p257 = scmp.eq.s32.totalorder %s256, 0
  %p258 = pneg %p257
  %260 = shalt.err (%p258)
  %s261 = scalar_lea.sflag [#allocation3], 3
  %262 = vsyncmov %s261
  %s263 = vpop.sfrf %262
  %p264 = scmp.eq.s32.totalorder %s263, 0
  %p265 = pneg %p264
  %267 = shalt.err (%p265)
  %s268 = scalar_lea.sflag [#allocation3], 4
  %269 = vsyncmov %s268
  %s270 = vpop.sfrf %269
  %p271 = scmp.eq.s32.totalorder %s270, 0
  %p272 = pneg %p271
  %274 = shalt.err (%p272)
  %s275 = scalar_lea.sflag [#allocation3], 5
  %276 = vsyncmov %s275
  %s277 = vpop.sfrf %276
  %p278 = scmp.eq.s32.totalorder %s277, 0
  %p279 = pneg %p278
  %281 = shalt.err (%p279)
  %s282 = scalar_lea.sflag [#allocation3], 6
  %283 = vsyncmov %s282
  %s284 = vpop.sfrf %283
  %p285 = scmp.eq.s32.totalorder %s284, 0
  %p286 = pneg %p285
  %288 = shalt.err (%p286)
  %s289 = scalar_lea.sflag [#allocation3], 7
  %290 = vsyncmov %s289
  %s291 = vpop.sfrf %290
  %p292 = scmp.eq.s32.totalorder %s291, 0
  %p293 = pneg %p292
  %295 = shalt.err (%p293)

</llo_original>
